<compile_context>
chip_gen: v6e
topology: v6e:2x2x1
jax: 0.10.0
libtpu: 0.0.40
codegen_flags: <defaults>
</compile_context>

<pallas_src>
import functools

import jax
import jax.numpy as jnp
from jax import lax
from jax.experimental import pallas as pl
from jax.experimental.pallas import tpu as pltpu


def _hill_math(x, coef):
    """y = x**coef / (1 + x**coef) — mirrors the PyTorch forward exactly."""
    if isinstance(coef, int):
        p = x if coef == 1 else lax.integer_pow(x, coef)  # VPU multiplies, no EUP exp/log
    else:
        p = jnp.power(x, coef)
    return p / (1.0 + p)


def _hill_kernel(x_ref, o_ref, *, coef):
    o_ref[...] = _hill_math(x_ref[...], coef)


def _round_up(n, m):
    return ((n + m - 1) // m) * m


def _sublane_multiple(dtype):
    bits = jnp.dtype(dtype).itemsize * 8
    if bits >= 32:
        return 8
    if bits == 16:
        return 16
    return 32


_LANE_CHOICES = (1024, 512, 256, 128)
_TARGET_BLOCK_BYTES = 4 * 1024 * 1024   # ~4 MiB/block -> ~16 MiB double-buffered in+out
_SINGLE_BLOCK_BYTES = 2 * 1024 * 1024   # below this, one full-array block is enough
_MIN_PALLAS_BYTES = 1 * 1024 * 1024     # below this, fused XLA beats pallas_call overhead


def hill_layer(x, coef=1, *, force_pallas=False):
    """Hill transfer: x**coef / (1 + x**coef), elementwise."""
    total = int(x.size)
    if total == 0:
        return x

    cols = next((c for c in _LANE_CHOICES if total % c == 0), None)
    tiny = x.nbytes < _MIN_PALLAS_BYTES

    if cols is None or (tiny and not force_pallas):
        # Ragged (size not a multiple of 128) or tiny input: a single fused XLA
        # elementwise op is strictly faster than pallas_call + pad/slice HBM passes.
        # TODO(synk): ragged sizes fall back to fused XLA rather than a masked Pallas tail.
        return _hill_math(x, coef)

    orig_shape = x.shape
    dtype = x.dtype
    itemsize = jnp.dtype(dtype).itemsize
    rows = total // cols
    sublane = _sublane_multiple(dtype)

    if x.nbytes <= _SINGLE_BLOCK_BYTES or rows < 2 * sublane:
        # Single block covering the whole (rows, cols) array: block dims equal the
        # full array dims, so no (8,128) divisibility issue and zero padding.
        tr = rows
    else:
        # Cap blocks at ~4 MiB (amortizes the ~0.35us per-step overhead on v7x's
        # 3.2 TB/s HBM) and guarantee >= 2 grid steps so both v7x TCs are used.
        max_tile_rows = max(
            sublane, (_TARGET_BLOCK_BYTES // (cols * itemsize)) // sublane * sublane
        )
        tr = min(max_tile_rows, _round_up(pl.cdiv(rows, 2), sublane))

    grid = (pl.cdiv(rows, tr),)  # a non-divisible last block is masked by Pallas

    x2d = x.reshape(rows, cols)  # lane-dense view — no pad, no trailing slice
    out2d = pl.pallas_call(
        functools.partial(_hill_kernel, coef=coef),
        out_shape=jax.ShapeDtypeStruct((rows, cols), dtype),
        grid=grid,
        in_specs=[pl.BlockSpec((tr, cols), lambda i: (i, 0))],
        out_specs=pl.BlockSpec((tr, cols), lambda i: (i, 0)),
        compiler_params=pltpu.CompilerParams(
            dimension_semantics=("parallel",),
            vmem_limit_bytes=40 * 1024 * 1024,
        ),
    )(x2d)
    return out2d.reshape(orig_shape)


if __name__ == "__main__":
    key = jax.random.PRNGKey(0)
    # Hill function domain is (0, inf); use strictly positive inputs.
    x = jax.random.uniform(
        key, (2, 4, 16, 16), dtype=jnp.float32, minval=0.01, maxval=5.0
    )

    ok = True
    for coef in (1, 2):
        y = jax.block_until_ready(hill_layer(x, coef=coef, force_pallas=True))
        p = jnp.power(x, coef)
        y_ref = p / (1.0 + p)
        ok &= (y.shape == x.shape) and bool(
            jnp.allclose(y, y_ref, atol=1e-6, rtol=1e-6)
        )

    # Default dispatch (tiny input -> fused XLA fast path) must also match.
    y_fast = jax.block_until_ready(hill_layer(x, coef=2))
    p2 = jnp.power(x, 2)
    ok &= bool(jnp.allclose(y_fast, p2 / (1.0 + p2), atol=1e-6, rtol=1e-6))

    assert ok, "mismatch vs reference"
    print("KERNEL_OK")
</pallas_src>

<mosaic_0001>
module attributes {stable_mosaic.version = 11 : i64} {
  func.func @_hill_kernel(%arg0: i32, %arg1: memref<2x1024xf32, #tpu.memory_space<vmem>>, %arg2: memref<2x1024xf32, #tpu.memory_space<vmem>>) attributes {dimension_semantics = [#tpu.dimension_semantics<parallel>], iteration_bounds = array<i64: 1>, scalar_prefetch = 0 : i64, scratch_operands = 0 : i64, tpu.core_type = #tpu.core_type<tc>, window_params = [{transform_indices = @transform_0, window_bounds = array<i64: 2, 1024>}, {transform_indices = @transform_1, window_bounds = array<i64: 2, 1024>}]} {
    %c0 = arith.constant 0 : index
    %c0_0 = arith.constant 0 : index
    %0 = vector.load %arg1[%c0, %c0_0] : memref<2x1024xf32, #tpu.memory_space<vmem>>, vector<2x1024xf32>
    %cst = arith.constant 1.000000e+00 : f32
    %1 = vector.broadcast %cst : f32 to vector<2x1024xf32>
    %2 = arith.addf %1, %0 : vector<2x1024xf32>
    %3 = arith.divf %0, %2 : vector<2x1024xf32>
    %c0_1 = arith.constant 0 : index
    %c0_2 = arith.constant 0 : index
    %4 = vector.load %arg2[%c0_1, %c0_2] : memref<2x1024xf32, #tpu.memory_space<vmem>>, vector<2x1024xf32>
    tpu.vector_store %arg2[%c0_1, %c0_2], %3 {strides = array<i32>} : memref<2x1024xf32, #tpu.memory_space<vmem>>, vector<2x1024xf32>,
    return
  }
  func.func @transform_0(%arg0: i32) -> (i32, i32) {
    %c0_i32 = arith.constant 0 : i32
    %c0_i32_0 = arith.constant 0 : i32
    return %arg0, %c0_i32 : i32, i32
  }
  func.func @transform_1(%arg0: i32) -> (i32, i32) {
    %c0_i32 = arith.constant 0 : i32
    %c0_i32_0 = arith.constant 0 : i32
    return %arg0, %c0_i32 : i32, i32
  }
}

</mosaic_0001>

<llo_original>
// kernel: tpu_custom_call.1
$region0: #{tpu_custom_call.1}
  #allocation0 [shape = 'u32[]', space=smem, size = 0x4, offset = 0x4, fixed_abs, tag = 'smem constant byte address 0x4 - core index']
  #allocation1 [shape = 'u32[144,128]{1,0:T(1,128)}', space=vmem, size = 0x12000, scoped, tag = 'internal scratch']
  %s0 = inlined_call_operand.hbm [shape: f32[2,1024], index: 0, kind: input, shape index: {}]
  %s1 = inlined_call_operand.hbm [shape: f32[2,1024], index: 1, kind: output, shape index: {}]
  %s2 = sld [smem:[#allocation0]]
  $region18: #{tpu_custom_call.1} parent=0
    _
  %s4 = ssub.s32 1, %s2
  %s5 = scalar_select 0, %s4, %s2
  $region1: #{tpu_custom_call.1} parent=0
    #allocation2 [shape = 'u8[8192]{0}', space=vmem, size = 0x2000, scoped, tag = 'input window, operand 0, single buffered']
    #allocation3 [shape = 's32[1]{0}', space=sflag, size = 0x4, scoped, tag = 'scoped memory for tpu_custom_call.1']
    #allocation4 [shape = 's32[1]{0}', space=sflag, size = 0x4, scoped, tag = 'scoped memory for tpu_custom_call.1']
    #allocation5 [shape = 'u8[8192]{0}', space=vmem, size = 0x2000, scoped, tag = 'output window, operand 0, single buffered']
    %6 = vsyncpa [#allocation3], 0
    %7 = vsyncpa [#allocation4], 0
    // Predicated region
    $region2: #{tpu_custom_call.1} parent=1 // pred_check
      _
    $region3: #{tpu_custom_call.1} parent=1 // pred_check_branch
      %9 = sbr.rel (0) target = $region5
    $region4: #{tpu_custom_call.1} parent=1 // pred_region
      %s11 = ssub.s32 256, 256
      %12 = vsyncadd [#allocation3], %s11
      %s14 = sshll.u32 [#allocation2], 4
      %s15 = int_to_ptr.vmem [resolvable:$true] %s14
      %17 = dma.hbm_to_vmem [thread:$0]  %s0, 256, %s15, [#allocation3]
    $region5: #{tpu_custom_call.1} parent=1 // pred_fallthru
      _
    // Predicated region
    $region6: #{tpu_custom_call.1} parent=1 // pred_check
      _
    $region7: #{tpu_custom_call.1} parent=1 // pred_check_branch
      %19 = sbr.rel (0) target = $region9
    $region8: #{tpu_custom_call.1} parent=1 // pred_region
      %20 = dma.done [#allocation3], 256
    $region9: #{tpu_custom_call.1} parent=1 // pred_fallthru
      _
    %v21 = vld [vmem:[#allocation2] sm:$0xff]
    %v22 = vld [vmem:[#allocation2 + $0x8] sm:$0xff]
    %v23 = vadd.f32 %v21, 1.0
    %v24 = vadd.f32 %v22, 1.0
    %v25 = vrcp.pop %v23
    %v26 = vmul.f32 %v21, %v25
    %v27 = vrcp.pop %v24
    %v28 = vmul.f32 %v22, %v27
    %29 = vst [vmem:[#allocation5] sm:$0xff] %v26
    %30 = vst [vmem:[#allocation5 + $0x8] sm:$0xff] %v28
    // Predicated region
    $region10: #{tpu_custom_call.1} parent=1 // pred_check
      _
    $region11: #{tpu_custom_call.1} parent=1 // pred_check_branch
      %32 = sbr.rel (0) target = $region13
    $region12: #{tpu_custom_call.1} parent=1 // pred_region
      %s34 = ssub.s32 256, 256
      %35 = vsyncadd [#allocation4], %s34
      %s37 = sshll.u32 [#allocation5], 4
      %s38 = int_to_ptr.vmem [resolvable:$true] %s37
      %40 = dma.vmem_to_hbm [thread:$0]  %s38, 256, %s1, [#allocation4]
    $region13: #{tpu_custom_call.1} parent=1 // pred_fallthru
      _
    // Predicated region
    $region14: #{tpu_custom_call.1} parent=1 // pred_check
      _
    $region15: #{tpu_custom_call.1} parent=1 // pred_check_branch
      %42 = sbr.rel (0) target = $region17
    $region16: #{tpu_custom_call.1} parent=1 // pred_region
      %43 = dma.done [#allocation4], 256
    $region17: #{tpu_custom_call.1} parent=1 // pred_fallthru
      _
    %44 = vsyncpa [#allocation3], 1
    %45 = vsyncpa [#allocation4], 1

</llo_original>
